<compile_context>
chip_gen: v5e
topology: v5e:2x2
jax: 0.10.0
libtpu: 0.0.40
codegen_flags: <defaults>
</compile_context>

<pallas_src>
import functools

import jax
import jax.numpy as jnp
from jax import lax
from jax.experimental import pallas as pl
from jax.experimental.pallas import tpu as pltpu


def residual_block_kernel(*refs, kernel_size, dilation, t_tile, pad, halo_blk,
                          use_halo, b_blk, cres, compute_dtype):
    """One (batch-block, time-tile) per grid step; tiles are channel-major (C, T)."""
    if use_halo:
        (x_ref, xh_ref, skp_ref, wd_ref, bd_ref, wo_ref, bo_ref,
         res_out_ref, skp_out_ref) = refs
    else:
        (x_ref, skp_ref, wd_ref, bd_ref, wo_ref, bo_ref,
         res_out_ref, skp_out_ref) = refs
        xh_ref = None

    K, d, cdt = kernel_size, dilation, compute_dtype

    wd = wd_ref[...]          # (2*Cres, K*Cres), compute dtype
    bd = bd_ref[...]          # (2*Cres, 1), f32
    wo = wo_ref[...]          # (Cres+Cskp, Cres), compute dtype
    bo = bo_ref[...]          # (Cres+Cskp, 1), f32

    if use_halo:
        is_first = pl.program_id(1) == 0

    for bi in range(b_blk):                      # small static unroll over batch rows
        xb = x_ref[bi]                           # (Cres, Tt), input dtype
        xb_c = xb.astype(cdt)

        if pad > 0:
            if use_halo:
                # Last `pad` lanes of the HALO_BLK-wide block that ends at this
                # tile's start; zeroed on the first time tile (causal boundary).
                halo = xh_ref[bi, :, halo_blk - pad:].astype(cdt)     # (Cres, pad)
                halo = jnp.where(is_first, jnp.zeros_like(halo), halo)
            else:
                halo = jnp.zeros((cres, pad), cdt)
            window = jnp.concatenate([halo, xb_c], axis=-1)           # (Cres, Tt+pad)
            # Fused taps: stack the K shifted views along sublanes.
            taps = [window[:, k * d: k * d + t_tile] for k in range(K - 1)]
            taps.append(xb_c)                                         # tap K-1: zero shift
            stacked = jnp.concatenate(taps, axis=0)                   # (K*Cres, Tt)
        else:
            stacked = xb_c                                            # K == 1

        # One MXU matmul for the whole dilated conv (both gate halves).
        acc = jnp.dot(wd, stacked, preferred_element_type=jnp.float32) + bd
        gate = jax.nn.sigmoid(acc[:cres]) * jnp.tanh(acc[cres:])      # (Cres, Tt), f32

        # One MXU matmul for both 1x1 heads (residual + skip).
        out = jnp.dot(wo, gate.astype(cdt),
                      preferred_element_type=jnp.float32) + bo        # (Cres+Cskp, Tt)

        res_out_ref[bi] = (xb.astype(jnp.float32) + out[:cres]).astype(res_out_ref.dtype)
        skp_out_ref[bi] = (skp_ref[bi].astype(jnp.float32) + out[cres:]).astype(skp_out_ref.dtype)


def _choose_tiles(B, Cres, Cskp, T, K, pad, in_itemsize, cdt_itemsize,
                  max_time_tile=2048, max_batch_block=8,
                  budget_bytes=32 * 1024 * 1024):
    """Pick (batch_block, time_tile, halo_block) with a VMEM-aware budget."""
    halo_blk = ((pad + 127) // 128) * 128 if pad > 0 else 0

    # Lane-dense time-tile candidates (largest first); multi-tile candidates must
    # be divisible by the halo block. Fall back to a single full-length tile.
    cands = []
    tt = (min(T, max_time_tile) // 128) * 128
    while tt >= 128:
        if T % tt == 0:
            multi = (T // tt) > 1
            if (not multi) or halo_blk == 0 or tt % halo_blk == 0:
                cands.append(tt)
        tt -= 128
    if not cands:
        cands = [T]

    bbs = [d for d in range(min(B, max_batch_block), 0, -1) if B % d == 0]

    def fits(bb, tt):
        multi = (T // tt) > 1
        # double-buffered HBM<->VMEM streams
        stream = 2 * bb * tt * 2 * (Cres + Cskp) * in_itemsize
        if multi and pad > 0:
            stream += 2 * bb * Cres * halo_blk * in_itemsize
        weights = 2 * ((2 * Cres * K * Cres + (Cres + Cskp) * Cres) * cdt_itemsize
                       + (3 * Cres + Cskp) * 4)
        # in-kernel temporaries (window/stack in compute dtype, acc/gate/out in f32)
        tmp = bb * ((Cres * (tt + pad) + (K + 1) * Cres * tt) * cdt_itemsize
                    + (4 * Cres + 2 * Cskp) * tt * 4)
        return stream + weights + tmp <= budget_bytes

    for tt in cands:                 # prefer the largest lane-dense tile,
        for bb in bbs:               # then the largest batch block that fits
            if fits(bb, tt):
                return bb, tt, halo_blk
    return 1, cands[-1], halo_blk


def residual_block(x, skp, params, kernel_size, dilation, *,
                   max_time_tile=2048, max_batch_block=8):
    """x: (B, Cres, T), skp: (B, Cskp, T) in PyTorch NCT layout (kept as-is).

    NOTE: skp's buffer is donated (input_output_aliases); do not reuse it after
    this call.
    """
    wd, bd, wr, br, ws, bs = params
    B, Cres, T = x.shape
    Cskp = skp.shape[1]
    K = kernel_size
    pad = (K - 1) * dilation

    # Compute dtype for MXU operands: bf16 if activations are bf16, else f32.
    cdt = jnp.bfloat16 if x.dtype == jnp.bfloat16 else jnp.float32
    in_itemsize = jnp.dtype(x.dtype).itemsize
    cdt_itemsize = jnp.dtype(cdt).itemsize

    Bb, Tt, HALO_BLK = _choose_tiles(B, Cres, Cskp, T, K, pad, in_itemsize,
                                     cdt_itemsize, max_time_tile=max_time_tile,
                                     max_batch_block=max_batch_block)
    n_t = T // Tt
    n_b = B // Bb
    use_halo = pad > 0 and n_t > 1
    if use_halo:
        assert Tt % HALO_BLK == 0 and Tt >= HALO_BLK >= pad, (Tt, HALO_BLK, pad)

    # ---- weight re-layout (tiny, once) ----
    # dilated conv (2*Cres, Cres, K) -> fused (2*Cres, K*Cres); column block k
    # multiplies x[t - (K-1-k)*dilation].
    wd_f = jnp.transpose(wd, (0, 2, 1)).reshape(2 * Cres, K * Cres).astype(cdt)
    bd2 = bd.reshape(2 * Cres, 1).astype(jnp.float32)
    # fused 1x1 heads: rows [0:Cres] -> residual delta, rows [Cres:] -> skip delta.
    wo = jnp.concatenate([wr[:, :, 0], ws[:, :, 0]], axis=0).astype(cdt)
    bo = jnp.concatenate([br, bs]).reshape(Cres + Cskp, 1).astype(jnp.float32)

    kern = functools.partial(
        residual_block_kernel,
        kernel_size=K, dilation=dilation, t_tile=Tt, pad=pad,
        halo_blk=HALO_BLK, use_halo=use_halo, b_blk=Bb,
        cres=Cres, compute_dtype=cdt)

    in_specs = [pl.BlockSpec((Bb, Cres, Tt), lambda b, t: (b, 0, t))]     # x
    args = [x]
    if use_halo:
        tpb = Tt // HALO_BLK
        # Small halo block ending exactly at this tile's start (clamped at t==0,
        # where the kernel zeroes it).
        in_specs.append(pl.BlockSpec(
            (Bb, Cres, HALO_BLK),
            lambda b, t: (b, 0, jnp.maximum(t * tpb - 1, 0))))
        args.append(x)
    skp_in_index = len(args)
    in_specs.append(pl.BlockSpec((Bb, Cskp, Tt), lambda b, t: (b, 0, t)))  # skp
    args.append(skp)
    in_specs += [
        pl.BlockSpec((2 * Cres, K * Cres), lambda b, t: (0, 0)),           # wd fused
        pl.BlockSpec((2 * Cres, 1), lambda b, t: (0, 0)),                  # bd
        pl.BlockSpec((Cres + Cskp, Cres), lambda b, t: (0, 0)),            # w_out fused
        pl.BlockSpec((Cres + Cskp, 1), lambda b, t: (0, 0)),               # b_out
    ]
    args += [wd_f, bd2, wo, bo]

    res_out, skp_out = pl.pallas_call(
        kern,
        out_shape=(jax.ShapeDtypeStruct((B, Cres, T), x.dtype),
                   jax.ShapeDtypeStruct((B, Cskp, T), skp.dtype)),
        grid_spec=pltpu.PrefetchScalarGridSpec(
            num_scalar_prefetch=0,
            grid=(n_b, n_t),
            in_specs=in_specs,
            out_specs=[pl.BlockSpec((Bb, Cres, Tt), lambda b, t: (b, 0, t)),
                       pl.BlockSpec((Bb, Cskp, Tt), lambda b, t: (b, 0, t))],
        ),
        # skp accumulates into its own (donated) HBM buffer.
        input_output_aliases={skp_in_index: 1},
        compiler_params=pltpu.CompilerParams(
            dimension_semantics=("parallel", "parallel"),
            vmem_limit_bytes=48 * 1024 * 1024),
    )(*args)

    return res_out, skp_out


def ref_forward(x, skp, params, kernel_size, dilation):
    """Pure-JAX reference matching the PyTorch module."""
    wd, bd, wr, br, ws, bs = params
    Cres = x.shape[1]
    pad = (kernel_size - 1) * dilation
    xp = lax.conv_general_dilated(
        x, wd, window_strides=(1,), padding=[(pad, 0)],
        rhs_dilation=(dilation,),
        dimension_numbers=("NCH", "OIH", "NCH")) + bd[None, :, None]
    xa, xb = xp[:, :Cres], xp[:, Cres:]
    gate = jax.nn.sigmoid(xa) * jnp.tanh(xb)
    res = x + jnp.einsum("oc,bct->bot", wr[:, :, 0], gate) + br[None, :, None]
    skpo = skp + jnp.einsum("oc,bct->bot", ws[:, :, 0], gate) + bs[None, :, None]
    return res, skpo


def _run_case(key, B, res_size, skp_size, T, kernel_size, dilation,
              dtype=jnp.float32, max_time_tile=2048, rtol=5e-5, atol=5e-5):
    ks = jax.random.split(key, 8)
    x_f = jax.random.normal(ks[0], (B, res_size, T), jnp.float32)
    skp_f = jax.random.normal(ks[1], (B, skp_size, T), jnp.float32)

    # PyTorch Conv1d weight layout: (Cout, Cin, K).
    wd = 0.1 * jax.random.normal(ks[2], (2 * res_size, res_size, kernel_size), jnp.float32)
    bd = 0.1 * jax.random.normal(ks[3], (2 * res_size,), jnp.float32)
    wr = 0.1 * jax.random.normal(ks[4], (res_size, res_size, 1), jnp.float32)
    br = 0.1 * jax.random.normal(ks[5], (res_size,), jnp.float32)
    ws = 0.1 * jax.random.normal(ks[6], (skp_size, res_size, 1), jnp.float32)
    bs = 0.1 * jax.random.normal(ks[7], (skp_size,), jnp.float32)
    params = (wd, bd, wr, br, ws, bs)

    # Reference first (the kernel donates skp's buffer for the in-place skip update).
    res_ref, skp_ref_out = ref_forward(x_f, skp_f, params, kernel_size, dilation)

    x = x_f.astype(dtype)
    skp = skp_f.astype(dtype)
    res_out, skp_out = residual_block(x, skp, params, kernel_size, dilation,
                                      max_time_tile=max_time_tile)
    jax.block_until_ready((res_out, skp_out))

    assert res_out.shape == (B, res_size, T) and res_out.dtype == dtype
    assert skp_out.shape == (B, skp_size, T) and skp_out.dtype == dtype
    assert jnp.allclose(res_out.astype(jnp.float32), res_ref, rtol=rtol, atol=atol)
    assert jnp.allclose(skp_out.astype(jnp.float32), skp_ref_out, rtol=rtol, atol=atol)


if __name__ == "__main__":
    key = jax.random.PRNGKey(0)
    k1, k2, k3, k4 = jax.random.split(key, 4)

    # Small, module-consistent shapes: single full-length tile (T not a lane multiple).
    _run_case(k1, B=2, res_size=16, skp_size=32, T=64, kernel_size=3, dilation=2)
    # Multi-tile cross-tile causal halo path (force 128-lane tiles -> 3 time tiles).
    _run_case(k2, B=2, res_size=16, skp_size=32, T=384, kernel_size=3, dilation=2,
              max_time_tile=128)
    # Halo wider than one 128-lane block (pad = 160 -> 256-lane halo), 2 time tiles.
    _run_case(k3, B=2, res_size=16, skp_size=32, T=512, kernel_size=2, dilation=160,
              max_time_tile=256)
    # bf16 activations + bf16 MXU operands (v6e/v7x fast path), looser tolerance.
    _run_case(k4, B=2, res_size=16, skp_size=32, T=384, kernel_size=3, dilation=2,
              dtype=jnp.bfloat16, rtol=5e-2, atol=1e-1)

    print("KERNEL_OK")
</pallas_src>

<mosaic_0001>
module attributes {stable_mosaic.version = 11 : i64} {
  func.func @residual_block_kernel(%arg0: i32, %arg1: i32, %arg2: memref<2x16x64xf32, #tpu.memory_space<vmem>>, %arg3: memref<2x32x64xf32, #tpu.memory_space<vmem>>, %arg4: memref<32x48xf32, #tpu.memory_space<vmem>>, %arg5: memref<32x1xf32, #tpu.memory_space<vmem>>, %arg6: memref<48x16xf32, #tpu.memory_space<vmem>>, %arg7: memref<48x1xf32, #tpu.memory_space<vmem>>, %arg8: memref<2x16x64xf32, #tpu.memory_space<vmem>>, %arg9: memref<2x32x64xf32, #tpu.memory_space<vmem>>) attributes {dimension_semantics = [#tpu.dimension_semantics<parallel>, #tpu.dimension_semantics<parallel>], iteration_bounds = array<i64: 1, 1>, scalar_prefetch = 0 : i64, scratch_operands = 0 : i64, tpu.core_type = #tpu.core_type<tc>, window_params = [{transform_indices = @transform_0, window_bounds = array<i64: 2, 16, 64>}, {transform_indices = @transform_1, window_bounds = array<i64: 2, 32, 64>}, {pipeline_mode = #tpu.pipeline_mode<synchronous>, transform_indices = @transform_2, window_bounds = array<i64: 32, 48>}, {pipeline_mode = #tpu.pipeline_mode<synchronous>, transform_indices = @transform_3, window_bounds = array<i64: 32, 1>}, {pipeline_mode = #tpu.pipeline_mode<synchronous>, transform_indices = @transform_4, window_bounds = array<i64: 48, 16>}, {pipeline_mode = #tpu.pipeline_mode<synchronous>, transform_indices = @transform_5, window_bounds = array<i64: 48, 1>}, {transform_indices = @transform_6, window_bounds = array<i64: 2, 16, 64>}, {transform_indices = @transform_7, window_bounds = array<i64: 2, 32, 64>}]} {
    %c0 = arith.constant 0 : index
    %c0_0 = arith.constant 0 : index
    %0 = vector.load %arg4[%c0, %c0_0] : memref<32x48xf32, #tpu.memory_space<vmem>>, vector<32x48xf32>
    %c0_1 = arith.constant 0 : index
    %c0_2 = arith.constant 0 : index
    %1 = vector.load %arg5[%c0_1, %c0_2] : memref<32x1xf32, #tpu.memory_space<vmem>>, vector<32x1xf32>
    %c0_3 = arith.constant 0 : index
    %c0_4 = arith.constant 0 : index
    %2 = vector.load %arg6[%c0_3, %c0_4] : memref<48x16xf32, #tpu.memory_space<vmem>>, vector<48x16xf32>
    %c0_5 = arith.constant 0 : index
    %c0_6 = arith.constant 0 : index
    %3 = vector.load %arg7[%c0_5, %c0_6] : memref<48x1xf32, #tpu.memory_space<vmem>>, vector<48x1xf32>
    %c0_7 = arith.constant 0 : index
    %c0_8 = arith.constant 0 : index
    %c0_9 = arith.constant 0 : index
    %4 = vector.load %arg2[%c0_7, %c0_8, %c0_9] : memref<2x16x64xf32, #tpu.memory_space<vmem>>, vector<1x16x64xf32>
    %5 = vector.shape_cast %4 : vector<1x16x64xf32> to vector<16x64xf32>
    %cst = arith.constant 0.000000e+00 : f32
    %6 = vector.broadcast %cst : f32 to vector<16x4xf32>
    %7 = tpu.concatenate %6, %5 in 1 : vector<16x4xf32>, vector<16x64xf32> -> vector<16x68xf32>
    %8 = vector.extract_strided_slice %7 {offsets = [0, 0], sizes = [16, 64], strides = [1, 1]} : vector<16x68xf32> to vector<16x64xf32>
    %9 = vector.extract_strided_slice %7 {offsets = [0, 2], sizes = [16, 64], strides = [1, 1]} : vector<16x68xf32> to vector<16x64xf32>
    %10 = tpu.concatenate %8, %9, %5 in 0 : vector<16x64xf32>, vector<16x64xf32>, vector<16x64xf32> -> vector<48x64xf32>
    %cst_10 = arith.constant dense<0.000000e+00> : vector<32x64xf32>
    %11 = tpu.matmul %0, %10, %cst_10 {dimension_numbers = #tpu.dot_dimension_numbers<[1], [0], [0], [1], [0, 0, 1, 1], [], []>} : vector<32x48xf32>, vector<48x64xf32>, vector<32x64xf32> -> vector<32x64xf32>
    %12 = vector.broadcast %1 : vector<32x1xf32> to vector<32x64xf32>
    %13 = arith.addf %11, %12 : vector<32x64xf32>
    %14 = vector.extract_strided_slice %13 {offsets = [0, 0], sizes = [16, 64], strides = [1, 1]} : vector<32x64xf32> to vector<16x64xf32>
    %15 = arith.negf %14 : vector<16x64xf32>
    %16 = math.exp %15 : vector<16x64xf32>
    %cst_11 = arith.constant 1.000000e+00 : f32
    %17 = vector.broadcast %cst_11 : f32 to vector<16x64xf32>
    %18 = arith.addf %17, %16 : vector<16x64xf32>
    %19 = arith.divf %17, %18 : vector<16x64xf32>
    %20 = vector.extract_strided_slice %13 {offsets = [16, 0], sizes = [16, 64], strides = [1, 1]} : vector<32x64xf32> to vector<16x64xf32>
    %21 = math.tanh %20 : vector<16x64xf32>
    %22 = arith.mulf %19, %21 : vector<16x64xf32>
    %cst_12 = arith.constant dense<0.000000e+00> : vector<48x64xf32>
    %23 = tpu.matmul %2, %22, %cst_12 {dimension_numbers = #tpu.dot_dimension_numbers<[1], [0], [0], [1], [0, 0, 1, 1], [], []>} : vector<48x16xf32>, vector<16x64xf32>, vector<48x64xf32> -> vector<48x64xf32>
    %24 = vector.broadcast %3 : vector<48x1xf32> to vector<48x64xf32>
    %25 = arith.addf %23, %24 : vector<48x64xf32>
    %26 = vector.extract_strided_slice %25 {offsets = [0, 0], sizes = [16, 64], strides = [1, 1]} : vector<48x64xf32> to vector<16x64xf32>
    %27 = arith.addf %5, %26 : vector<16x64xf32>
    %c0_13 = arith.constant 0 : index
    %c0_14 = arith.constant 0 : index
    %c0_15 = arith.constant 0 : index
    %28 = vector.load %arg8[%c0_13, %c0_14, %c0_15] : memref<2x16x64xf32, #tpu.memory_space<vmem>>, vector<1x16x64xf32>
    %29 = vector.shape_cast %28 : vector<1x16x64xf32> to vector<16x64xf32>
    %30 = vector.shape_cast %27 : vector<16x64xf32> to vector<1x16x64xf32>
    tpu.vector_store %arg8[%c0_13, %c0_14, %c0_15], %30 {strides = array<i32>} : memref<2x16x64xf32, #tpu.memory_space<vmem>>, vector<1x16x64xf32>,
    %c0_16 = arith.constant 0 : index
    %c0_17 = arith.constant 0 : index
    %c0_18 = arith.constant 0 : index
    %31 = vector.load %arg3[%c0_16, %c0_17, %c0_18] : memref<2x32x64xf32, #tpu.memory_space<vmem>>, vector<1x32x64xf32>
    %32 = vector.shape_cast %31 : vector<1x32x64xf32> to vector<32x64xf32>
    %33 = vector.extract_strided_slice %25 {offsets = [16, 0], sizes = [32, 64], strides = [1, 1]} : vector<48x64xf32> to vector<32x64xf32>
    %34 = arith.addf %32, %33 : vector<32x64xf32>
    %c0_19 = arith.constant 0 : index
    %c0_20 = arith.constant 0 : index
    %c0_21 = arith.constant 0 : index
    %35 = vector.load %arg9[%c0_19, %c0_20, %c0_21] : memref<2x32x64xf32, #tpu.memory_space<vmem>>, vector<1x32x64xf32>
    %36 = vector.shape_cast %35 : vector<1x32x64xf32> to vector<32x64xf32>
    %37 = vector.shape_cast %34 : vector<32x64xf32> to vector<1x32x64xf32>
    tpu.vector_store %arg9[%c0_19, %c0_20, %c0_21], %37 {strides = array<i32>} : memref<2x32x64xf32, #tpu.memory_space<vmem>>, vector<1x32x64xf32>,
    %c1 = arith.constant 1 : index
    %c0_22 = arith.constant 0 : index
    %c0_23 = arith.constant 0 : index
    %38 = vector.load %arg2[%c1, %c0_22, %c0_23] : memref<2x16x64xf32, #tpu.memory_space<vmem>>, vector<1x16x64xf32>
    %39 = vector.shape_cast %38 : vector<1x16x64xf32> to vector<16x64xf32>
    %cst_24 = arith.constant 0.000000e+00 : f32
    %40 = vector.broadcast %cst_24 : f32 to vector<16x4xf32>
    %41 = tpu.concatenate %40, %39 in 1 : vector<16x4xf32>, vector<16x64xf32> -> vector<16x68xf32>
    %42 = vector.extract_strided_slice %41 {offsets = [0, 0], sizes = [16, 64], strides = [1, 1]} : vector<16x68xf32> to vector<16x64xf32>
    %43 = vector.extract_strided_slice %41 {offsets = [0, 2], sizes = [16, 64], strides = [1, 1]} : vector<16x68xf32> to vector<16x64xf32>
    %44 = tpu.concatenate %42, %43, %39 in 0 : vector<16x64xf32>, vector<16x64xf32>, vector<16x64xf32> -> vector<48x64xf32>
    %cst_25 = arith.constant dense<0.000000e+00> : vector<32x64xf32>
    %45 = tpu.matmul %0, %44, %cst_25 {dimension_numbers = #tpu.dot_dimension_numbers<[1], [0], [0], [1], [0, 0, 1, 1], [], []>} : vector<32x48xf32>, vector<48x64xf32>, vector<32x64xf32> -> vector<32x64xf32>
    %46 = vector.broadcast %1 : vector<32x1xf32> to vector<32x64xf32>
    %47 = arith.addf %45, %46 : vector<32x64xf32>
    %48 = vector.extract_strided_slice %47 {offsets = [0, 0], sizes = [16, 64], strides = [1, 1]} : vector<32x64xf32> to vector<16x64xf32>
    %49 = arith.negf %48 : vector<16x64xf32>
    %50 = math.exp %49 : vector<16x64xf32>
    %cst_26 = arith.constant 1.000000e+00 : f32
    %51 = vector.broadcast %cst_26 : f32 to vector<16x64xf32>
    %52 = arith.addf %51, %50 : vector<16x64xf32>
    %53 = arith.divf %51, %52 : vector<16x64xf32>
    %54 = vector.extract_strided_slice %47 {offsets = [16, 0], sizes = [16, 64], strides = [1, 1]} : vector<32x64xf32> to vector<16x64xf32>
    %55 = math.tanh %54 : vector<16x64xf32>
    %56 = arith.mulf %53, %55 : vector<16x64xf32>
    %cst_27 = arith.constant dense<0.000000e+00> : vector<48x64xf32>
    %57 = tpu.matmul %2, %56, %cst_27 {dimension_numbers = #tpu.dot_dimension_numbers<[1], [0], [0], [1], [0, 0, 1, 1], [], []>} : vector<48x16xf32>, vector<16x64xf32>, vector<48x64xf32> -> vector<48x64xf32>
    %58 = vector.broadcast %3 : vector<48x1xf32> to vector<48x64xf32>
    %59 = arith.addf %57, %58 : vector<48x64xf32>
    %60 = vector.extract_strided_slice %59 {offsets = [0, 0], sizes = [16, 64], strides = [1, 1]} : vector<48x64xf32> to vector<16x64xf32>
    %61 = arith.addf %39, %60 : vector<16x64xf32>
    %c1_28 = arith.constant 1 : index
    %c0_29 = arith.constant 0 : index
    %c0_30 = arith.constant 0 : index
    %62 = vector.load %arg8[%c1_28, %c0_29, %c0_30] : memref<2x16x64xf32, #tpu.memory_space<vmem>>, vector<1x16x64xf32>
    %63 = vector.shape_cast %62 : vector<1x16x64xf32> to vector<16x64xf32>
    %64 = vector.shape_cast %61 : vector<16x64xf32> to vector<1x16x64xf32>
    tpu.vector_store %arg8[%c1_28, %c0_29, %c0_30], %64 {strides = array<i32>} : memref<2x16x64xf32, #tpu.memory_space<vmem>>, vector<1x16x64xf32>,
    %c1_31 = arith.constant 1 : index
    %c0_32 = arith.constant 0 : index
    %c0_33 = arith.constant 0 : index
    %65 = vector.load %arg3[%c1_31, %c0_32, %c0_33] : memref<2x32x64xf32, #tpu.memory_space<vmem>>, vector<1x32x64xf32>
    %66 = vector.shape_cast %65 : vector<1x32x64xf32> to vector<32x64xf32>
    %67 = vector.extract_strided_slice %59 {offsets = [16, 0], sizes = [32, 64], strides = [1, 1]} : vector<48x64xf32> to vector<32x64xf32>
    %68 = arith.addf %66, %67 : vector<32x64xf32>
    %c1_34 = arith.constant 1 : index
    %c0_35 = arith.constant 0 : index
    %c0_36 = arith.constant 0 : index
    %69 = vector.load %arg9[%c1_34, %c0_35, %c0_36] : memref<2x32x64xf32, #tpu.memory_space<vmem>>, vector<1x32x64xf32>
    %70 = vector.shape_cast %69 : vector<1x32x64xf32> to vector<32x64xf32>
    %71 = vector.shape_cast %68 : vector<32x64xf32> to vector<1x32x64xf32>
    tpu.vector_store %arg9[%c1_34, %c0_35, %c0_36], %71 {strides = array<i32>} : memref<2x32x64xf32, #tpu.memory_space<vmem>>, vector<1x32x64xf32>,
    return
  }
  func.func @transform_0(%arg0: i32, %arg1: i32) -> (i32, i32, i32) {
    %c0_i32 = arith.constant 0 : i32
    %c0_i32_0 = arith.constant 0 : i32
    return %arg0, %c0_i32, %arg1 : i32, i32, i32
  }
  func.func @transform_1(%arg0: i32, %arg1: i32) -> (i32, i32, i32) {
    %c0_i32 = arith.constant 0 : i32
    %c0_i32_0 = arith.constant 0 : i32
    return %arg0, %c0_i32, %arg1 : i32, i32, i32
  }
  func.func @transform_2(%arg0: i32, %arg1: i32) -> (i32, i32) {
    %c0_i32 = arith.constant 0 : i32
    %c0_i32_0 = arith.constant 0 : i32
    %c0_i32_1 = arith.constant 0 : i32
    return %c0_i32, %c0_i32_0 : i32, i32
  }
  func.func @transform_3(%arg0: i32, %arg1: i32) -> (i32, i32) {
    %c0_i32 = arith.constant 0 : i32
    %c0_i32_0 = arith.constant 0 : i32
    %c0_i32_1 = arith.constant 0 : i32
    return %c0_i32, %c0_i32_0 : i32, i32
  }
  func.func @transform_4(%arg0: i32, %arg1: i32) -> (i32, i32) {
    %c0_i32 = arith.constant 0 : i32
    %c0_i32_0 = arith.constant 0 : i32
    %c0_i32_1 = arith.constant 0 : i32
    return %c0_i32, %c0_i32_0 : i32, i32
  }
  func.func @transform_5(%arg0: i32, %arg1: i32) -> (i32, i32) {
    %c0_i32 = arith.constant 0 : i32
    %c0_i32_0 = arith.constant 0 : i32
    %c0_i32_1 = arith.constant 0 : i32
    return %c0_i32, %c0_i32_0 : i32, i32
  }
  func.func @transform_6(%arg0: i32, %arg1: i32) -> (i32, i32, i32) {
    %c0_i32 = arith.constant 0 : i32
    %c0_i32_0 = arith.constant 0 : i32
    return %arg0, %c0_i32, %arg1 : i32, i32, i32
  }
  func.func @transform_7(%arg0: i32, %arg1: i32) -> (i32, i32, i32) {
    %c0_i32 = arith.constant 0 : i32
    %c0_i32_0 = arith.constant 0 : i32
    return %arg0, %c0_i32, %arg1 : i32, i32, i32
  }
}

</mosaic_0001>

<llo_original>
// kernel: tpu_custom_call.1
$region0: #{tpu_custom_call.1}
  #allocation0 [shape = 'u32[]', space=smem, size = 0x4, offset = 0x4, fixed_abs, tag = 'smem constant byte address 0x4 - core index']
  #allocation1 [shape = 'u32[72,128]{1,0:T(1,128)}', space=vmem, size = 0x9000, scoped, tag = 'internal scratch']
  %s0 = inlined_call_operand.vmem [shape: f32[2,16,64], index: 0, kind: input, shape index: {}]
  %s1 = inlined_call_operand.hbm [shape: f32[2,32,64], index: 1, kind: input, shape index: {}, may-alias: {1,7}]
  %s2 = inlined_call_operand.vmem [shape: f32[32,48], index: 2, kind: input, shape index: {}]
  %s3 = inlined_call_operand.vmem [shape: f32[32,1], index: 3, kind: input, shape index: {}]
  %s4 = inlined_call_operand.vmem [shape: f32[48,16], index: 4, kind: input, shape index: {}]
  %s5 = inlined_call_operand.vmem [shape: f32[48,1], index: 5, kind: input, shape index: {}]
  %s6 = inlined_call_operand.hbm [shape: f32[2,16,64], index: 6, kind: output, shape index: {0}]
  %s7 = inlined_call_operand.hbm [shape: f32[2,32,64], index: 7, kind: output, shape index: {1}, may-alias: {1,7}]
  %8 = xla_tuple %s6, %s7
  %s9 = sld [smem:[#allocation0]]
  $region46: #{tpu_custom_call.1} parent=0
    _
  %s11 = ssub.s32 1, %s9
  %s12 = scalar_select 0, %s11, %s9
  $region1: #{tpu_custom_call.1} parent=0
    #allocation2 [shape = 'u8[32768]{0}', space=vmem, size = 0x8000, scoped, tag = 'input window, operand 1, single buffered']
    #allocation3 [shape = 's32[1]{0}', space=sflag, size = 0x4, scoped, tag = 'scoped memory for tpu_custom_call.1']
    #allocation4 [shape = 's32[1]{0}', space=sflag, size = 0x4, scoped, tag = 'scoped memory for tpu_custom_call.1']
    #allocation5 [shape = 'u8[16384]{0}', space=vmem, size = 0x4000, scoped, tag = 'output window, operand 0, single buffered']
    #allocation6 [shape = 'u8[32768]{0}', space=vmem, size = 0x8000, scoped, tag = 'output window, operand 1, single buffered']
    #allocation7 [shape = 's32[1]{0}', space=sflag, size = 0x4, scoped, tag = 'scoped memory for tpu_custom_call.1']
    %13 = vsyncpa [#allocation3], 0
    %14 = vsyncpa [#allocation4], 0
    %15 = vsyncpa [#allocation7], 0
    // Predicated region
    $region2: #{tpu_custom_call.1} parent=1 // pred_check
      _
    $region3: #{tpu_custom_call.1} parent=1 // pred_check_branch
      %17 = sbr.rel (0) target = $region5
    $region4: #{tpu_custom_call.1} parent=1 // pred_region
      _
    $region5: #{tpu_custom_call.1} parent=1 // pred_fallthru
      _
    // Predicated region
    $region6: #{tpu_custom_call.1} parent=1 // pred_check
      _
    $region7: #{tpu_custom_call.1} parent=1 // pred_check_branch
      %19 = sbr.rel (0) target = $region9
    $region8: #{tpu_custom_call.1} parent=1 // pred_region
      %21 = vsyncadd [#allocation3], 0
      %s22 = sshll.u32 %s1, 4
      %s23 = int_to_ptr.hbm [resolvable:$true] %s22
      %s24 = sshll.u32 [#allocation2], 4
      %s25 = int_to_ptr.vmem [resolvable:$true] %s24
      %30 = dma.hbm_to_vmem [thread:$0]  %s23, 1024, %s25, [#allocation3], 128, 128, 8
    $region9: #{tpu_custom_call.1} parent=1 // pred_fallthru
      _
    // Predicated region
    $region10: #{tpu_custom_call.1} parent=1 // pred_check
      _
    $region11: #{tpu_custom_call.1} parent=1 // pred_check_branch
      %32 = sbr.rel (0) target = $region13
    $region12: #{tpu_custom_call.1} parent=1 // pred_region
      _
    $region13: #{tpu_custom_call.1} parent=1 // pred_fallthru
      _
    // Predicated region
    $region14: #{tpu_custom_call.1} parent=1 // pred_check
      _
    $region15: #{tpu_custom_call.1} parent=1 // pred_check_branch
      %34 = sbr.rel (0) target = $region17
    $region16: #{tpu_custom_call.1} parent=1 // pred_region
      _
    $region17: #{tpu_custom_call.1} parent=1 // pred_fallthru
      _
    // Predicated region
    $region18: #{tpu_custom_call.1} parent=1 // pred_check
      _
    $region19: #{tpu_custom_call.1} parent=1 // pred_check_branch
      %36 = sbr.rel (0) target = $region21
    $region20: #{tpu_custom_call.1} parent=1 // pred_region
      _
    $region21: #{tpu_custom_call.1} parent=1 // pred_fallthru
      _
    // Predicated region
    $region22: #{tpu_custom_call.1} parent=1 // pred_check
      _
    $region23: #{tpu_custom_call.1} parent=1 // pred_check_branch
      %38 = sbr.rel (0) target = $region25
    $region24: #{tpu_custom_call.1} parent=1 // pred_region
      _
    $region25: #{tpu_custom_call.1} parent=1 // pred_fallthru
      _
    // Predicated region
    $region26: #{tpu_custom_call.1} parent=1 // pred_check
      _
    $region27: #{tpu_custom_call.1} parent=1 // pred_check_branch
      %40 = sbr.rel (0) target = $region29
    $region28: #{tpu_custom_call.1} parent=1 // pred_region
      %42 = dma.done [#allocation3], 1024
    $region29: #{tpu_custom_call.1} parent=1 // pred_fallthru
      _
    %v43 = vld [vmem:[%s2] sm:$0xff]
    %v44 = vld [vmem:[%s2 + $0x8] sm:$0xff]
    %v45 = vld [vmem:[%s2 + $0x10] sm:$0xff]
    %v46 = vld [vmem:[%s2 + $0x18] sm:$0xff]
    %v47 = vld [vmem:[%s3] sm:$0xff]
    %v48 = vld [vmem:[%s3 + $0x8] sm:$0xff]
    %v49 = vld [vmem:[%s3 + $0x10] sm:$0xff]
    %v50 = vld [vmem:[%s3 + $0x18] sm:$0xff]
    %v51 = vld [vmem:[%s4] sm:$0xff]
    %v52 = vld [vmem:[%s4 + $0x8] sm:$0xff]
    %v53 = vld [vmem:[%s4 + $0x10] sm:$0xff]
    %v54 = vld [vmem:[%s4 + $0x18] sm:$0xff]
    %v55 = vld [vmem:[%s4 + $0x20] sm:$0xff]
    %v56 = vld [vmem:[%s4 + $0x28] sm:$0xff]
    %v57 = vld [vmem:[%s5] sm:$0xff]
    %v58 = vld [vmem:[%s5 + $0x8] sm:$0xff]
    %v59 = vld [vmem:[%s5 + $0x10] sm:$0xff]
    %v60 = vld [vmem:[%s5 + $0x18] sm:$0xff]
    %v61 = vld [vmem:[%s5 + $0x20] sm:$0xff]
    %v62 = vld [vmem:[%s5 + $0x28] sm:$0xff]
    %v63 = vld [vmem:[%s0] sm:$0xff]
    %v64 = vld [vmem:[%s0 + $0x8] sm:$0xff]
    %67 = vrot.lane.b32.xlu0 %v63, 4
    %v68 = vpop.permute.xlu0 %67
    %69 = vrot.lane.b32.xlu0 %v64, 4
    %v70 = vpop.permute.xlu0 %69
    %vm73 = vcmask 31744
    %v74 = vsel %vm73, 0.0, %v68
    %v75 = vsel %vm73, 0.0, %v70
    %78 = vrot.lane.b32.xlu0 %v74, 126
    %v79 = vpop.permute.xlu0 %78
    %80 = vrot.lane.b32.xlu0 %v75, 126
    %v81 = vpop.permute.xlu0 %80
    %85 = vset.pattern.permute.xlu0 0
    %86 = vperm.xlu0 %85, %v47
    %v87 = vpop.permute.xlu0 %86
    %90 = vset.pattern.permute.xlu0 0
    %91 = vperm.xlu0 %90, %v48
    %v92 = vpop.permute.xlu0 %91
    %95 = vset.pattern.permute.xlu0 0
    %96 = vperm.xlu0 %95, %v49
    %v97 = vpop.permute.xlu0 %96
    %100 = vset.pattern.permute.xlu0 0
    %101 = vperm.xlu0 %100, %v50
    %v102 = vpop.permute.xlu0 %101
    %vm104 = vcmask 392192
    %v106 = vsel %vm104, %v43, 0
    %v109 = vsel %vm104, %v44, 0
    %v112 = vsel %vm104, %v45, 0
    %v115 = vsel %vm104, %v46, 0
    %117 = vmatpush.msra.mxu0 0.0
    %118 = vmatpush.msra.mxu0 0.0
    %119 = vmatpush.msra.mxu0 0.0
    %120 = vmatpush.msra.mxu0 0.0
    %121 = vmatpush.msra.mxu0 0.0
    %122 = vmatpush.msra.mxu0 0.0
    %123 = vmatpush.msra.mxu0 0.0
    %124 = vmatpush.msra.mxu0 0.0
    %125 = vmatpush.msra.mxu0 0.0
    %126 = vmatpush.msra.mxu0 0.0
    %127 = vmatpush.msra.mxu0 %v64
    %128 = vmatpush.msra.mxu0 %v63
    %129 = vmatpush.msra.mxu0 %v81
    %130 = vmatpush.msra.mxu0 %v79
    %131 = vmatpush.msra.mxu0 %v75
    %132 = vmatpush.msra.mxu0 %v74
    %133 = vmatmul.f32.gmra.mxu0 %v106
    %v134 = vpop.f32.mrf.mxu0
    %v135 = vadd.f32 %v87, %v134
    %136 = vmatmul.f32.gmra.mxu0 %v109
    %v137 = vpop.f32.mrf.mxu0
    %v138 = vadd.f32 %v92, %v137
    %139 = vmatmul.f32.gmra.mxu0 %v112
    %v140 = vpop.f32.mrf.mxu0
    %v141 = vadd.f32 %v97, %v140
    %142 = vmatmul.f32.gmra.mxu0 %v115
    %v143 = vpop.f32.mrf.mxu0
    %v144 = vadd.f32 %v102, %v143
    %145 = vdwg.mxu0
    %v146 = vxor.u32 %v135, 2147483648
    %v147 = vxor.u32 %v138, 2147483648
    %v148 = vmul.f32 %v146, 1.442695
    %v149 = vpow.pop %v148
    %v150 = vmul.f32 %v147, 1.442695
    %v151 = vpow.pop %v150
    %v152 = vadd.f32 %v149, 1.0
    %v153 = vadd.f32 %v151, 1.0
    %v154 = vrcp.pop %v152
    %v155 = vmul.f32 %v152, %v154
    %v156 = vsub.f32 1.0, %v155
    %v157 = vmul.f32 %v154, %v156
    %v158 = vadd.f32 %v154, %v157
    %vm159 = vweird.f32 %v152
    %vm160 = vweird.f32 %v154
    %vm161 = vmor %vm159, %vm160
    %v162 = vsel %vm161, %v154, %v158
    %v163 = vand.u32 2147483647, %v152
    %vm164 = vcmp.eq.f32.partialorder %v163, 8.507059e+37
    %v165 = vand.u32 %v152, 2147483648
    %v166 = vor.u32 1.1754944e-38, %v165
    %v167 = vsel %vm164, %v166, %v162
    %v168 = vmul.f32 1.0, %v167
    %v169 = vrcp.pop %v153
    %v170 = vmul.f32 %v153, %v169
    %v171 = vsub.f32 1.0, %v170
    %v172 = vmul.f32 %v169, %v171
    %v173 = vadd.f32 %v169, %v172
    %vm174 = vweird.f32 %v153
    %vm175 = vweird.f32 %v169
    %vm176 = vmor %vm174, %vm175
    %v177 = vsel %vm176, %v169, %v173
    %v178 = vand.u32 2147483647, %v153
    %vm179 = vcmp.eq.f32.partialorder %v178, 8.507059e+37
    %v180 = vand.u32 %v153, 2147483648
    %v181 = vor.u32 1.1754944e-38, %v180
    %v182 = vsel %vm179, %v181, %v177
    %v183 = vmul.f32 1.0, %v182
    %v184 = vtanh.pop %v141
    %v185 = vtanh.pop %v144
    %v186 = vmul.f32 %v168, %v184
    %v187 = vmul.f32 %v183, %v185
    %189 = vset.pattern.permute.xlu0 0
    %190 = vperm.xlu0 %189, %v57
    %v191 = vpop.permute.xlu0 %190
    %194 = vset.pattern.permute.xlu0 0
    %195 = vperm.xlu0 %194, %v58
    %v196 = vpop.permute.xlu0 %195
    %199 = vset.pattern.permute.xlu0 0
    %200 = vperm.xlu0 %199, %v59
    %v201 = vpop.permute.xlu0 %200
    %204 = vset.pattern.permute.xlu0 0
    %205 = vperm.xlu0 %204, %v60
    %v206 = vpop.permute.xlu0 %205
    %209 = vset.pattern.permute.xlu0 0
    %210 = vperm.xlu0 %209, %v61
    %v211 = vpop.permute.xlu0 %210
    %214 = vset.pattern.permute.xlu0 0
    %215 = vperm.xlu0 %214, %v62
    %v216 = vpop.permute.xlu0 %215
    %vm218 = vcmask 130048
    %v220 = vsel %vm218, %v51, 0
    %v223 = vsel %vm218, %v52, 0
    %v226 = vsel %vm218, %v53, 0
    %v229 = vsel %vm218, %v54, 0
    %v232 = vsel %vm218, %v55, 0
    %v235 = vsel %vm218, %v56, 0
    %237 = vmatpush.msra.mxu0 0.0
    %238 = vmatpush.msra.mxu0 0.0
    %239 = vmatpush.msra.mxu0 0.0
    %240 = vmatpush.msra.mxu0 0.0
    %241 = vmatpush.msra.mxu0 0.0
    %242 = vmatpush.msra.mxu0 0.0
    %243 = vmatpush.msra.mxu0 0.0
    %244 = vmatpush.msra.mxu0 0.0
    %245 = vmatpush.msra.mxu0 0.0
    %246 = vmatpush.msra.mxu0 0.0
    %247 = vmatpush.msra.mxu0 0.0
    %248 = vmatpush.msra.mxu0 0.0
    %249 = vmatpush.msra.mxu0 0.0
    %250 = vmatpush.msra.mxu0 0.0
    %251 = vmatpush.msra.mxu0 %v187
    %252 = vmatpush.msra.mxu0 %v186
    %253 = vmatmul.f32.gmra.mxu0 %v220
    %v254 = vpop.f32.mrf.mxu0
    %v255 = vadd.f32 %v191, %v254
    %256 = vmatmul.f32.gmra.mxu0 %v223
    %v257 = vpop.f32.mrf.mxu0
    %v258 = vadd.f32 %v196, %v257
    %259 = vmatmul.f32.gmra.mxu0 %v226
    %v260 = vpop.f32.mrf.mxu0
    %v261 = vadd.f32 %v201, %v260
    %262 = vmatmul.f32.gmra.mxu0 %v229
    %v263 = vpop.f32.mrf.mxu0
    %v264 = vadd.f32 %v206, %v263
    %265 = vmatmul.f32.gmra.mxu0 %v232
    %v266 = vpop.f32.mrf.mxu0
    %v267 = vadd.f32 %v211, %v266
    %268 = vmatmul.f32.gmra.mxu0 %v235
    %v269 = vpop.f32.mrf.mxu0
    %v270 = vadd.f32 %v216, %v269
    %271 = vdwg.mxu0
    %v272 = vadd.f32 %v63, %v255
    %v273 = vadd.f32 %v64, %v258
    %vm274 = vcmask 523264
    %275 = vst.msk [vmem:[#allocation5] sm:$0xff] %vm274, %v272
    %276 = vst.msk [vmem:[#allocation5 + $0x8] sm:$0xff] %vm274, %v273
    %v277 = vld [vmem:[#allocation2] sm:$0xff]
    %v278 = vld [vmem:[#allocation2 + $0x8] sm:$0xff]
    %v279 = vld [vmem:[#allocation2 + $0x10] sm:$0xff]
    %v280 = vld [vmem:[#allocation2 + $0x18] sm:$0xff]
    %v281 = vadd.f32 %v277, %v261
    %v282 = vadd.f32 %v278, %v264
    %v283 = vadd.f32 %v279, %v267
    %v284 = vadd.f32 %v280, %v270
    %285 = vst.msk [vmem:[#allocation6] sm:$0xff] %vm274, %v281
    %286 = vst.msk [vmem:[#allocation6 + $0x8] sm:$0xff] %vm274, %v282
    %287 = vst.msk [vmem:[#allocation6 + $0x10] sm:$0xff] %vm274, %v283
    %288 = vst.msk [vmem:[#allocation6 + $0x18] sm:$0xff] %vm274, %v284
    %s289 = scalar_lea.vmem %s0, 16
    %v290 = vld [vmem:[%s289] sm:$0xff]
    %v291 = vld [vmem:[%s289 + $0x8] sm:$0xff]
    %294 = vrot.lane.b32.xlu0 %v290, 4
    %v295 = vpop.permute.xlu0 %294
    %296 = vrot.lane.b32.xlu0 %v291, 4
    %v297 = vpop.permute.xlu0 %296
    %v300 = vsel %vm73, 0.0, %v295
    %v301 = vsel %vm73, 0.0, %v297
    %304 = vrot.lane.b32.xlu0 %v300, 126
    %v305 = vpop.permute.xlu0 %304
    %306 = vrot.lane.b32.xlu0 %v301, 126
    %v307 = vpop.permute.xlu0 %306
    %310 = vmatpush.msra.mxu0 0.0
    %311 = vmatpush.msra.mxu0 0.0
    %312 = vmatpush.msra.mxu0 0.0
    %313 = vmatpush.msra.mxu0 0.0
    %314 = vmatpush.msra.mxu0 0.0
    %315 = vmatpush.msra.mxu0 0.0
    %316 = vmatpush.msra.mxu0 0.0
    %317 = vmatpush.msra.mxu0 0.0
    %318 = vmatpush.msra.mxu0 0.0
    %319 = vmatpush.msra.mxu0 0.0
    %320 = vmatpush.msra.mxu0 %v291
    %321 = vmatpush.msra.mxu0 %v290
    %322 = vmatpush.msra.mxu0 %v307
    %323 = vmatpush.msra.mxu0 %v305
    %324 = vmatpush.msra.mxu0 %v301
    %325 = vmatpush.msra.mxu0 %v300
    %326 = vmatmul.f32.gmra.mxu0 %v106
    %v327 = vpop.f32.mrf.mxu0
    %v328 = vadd.f32 %v87, %v327
    %329 = vmatmul.f32.gmra.mxu0 %v109
    %v330 = vpop.f32.mrf.mxu0
    %v331 = vadd.f32 %v92, %v330
    %332 = vmatmul.f32.gmra.mxu0 %v112
    %v333 = vpop.f32.mrf.mxu0
    %v334 = vadd.f32 %v97, %v333
    %335 = vmatmul.f32.gmra.mxu0 %v115
    %v336 = vpop.f32.mrf.mxu0
    %v337 = vadd.f32 %v102, %v336
    %338 = vdwg.mxu0
    %v339 = vxor.u32 %v328, 2147483648
    %v340 = vxor.u32 %v331, 2147483648
    %v341 = vmul.f32 %v339, 1.442695
    %v342 = vpow.pop %v341
    %v343 = vmul.f32 %v340, 1.442695
    %v344 = vpow.pop %v343
    %v345 = vadd.f32 %v342, 1.0
    %v346 = vadd.f32 %v344, 1.0
    %v347 = vrcp.pop %v345
    %v348 = vmul.f32 %v345, %v347
    %v349 = vsub.f32 1.0, %v348
    %v350 = vmul.f32 %v347, %v349
    %v351 = vadd.f32 %v347, %v350
    %vm352 = vweird.f32 %v345
    %vm353 = vweird.f32 %v347
    %vm354 = vmor %vm352, %vm353
    %v355 = vsel %vm354, %v347, %v351
    %v356 = vand.u32 2147483647, %v345
    %vm357 = vcmp.eq.f32.partialorder %v356, 8.507059e+37
    %v358 = vand.u32 %v345, 2147483648
    %v359 = vor.u32 1.1754944e-38, %v358
    %v360 = vsel %vm357, %v359, %v355
    %v361 = vmul.f32 1.0, %v360
    %v362 = vrcp.pop %v346
    %v363 = vmul.f32 %v346, %v362
    %v364 = vsub.f32 1.0, %v363
    %v365 = vmul.f32 %v362, %v364
    %v366 = vadd.f32 %v362, %v365
    %vm367 = vweird.f32 %v346
    %vm368 = vweird.f32 %v362
    %vm369 = vmor %vm367, %vm368
    %v370 = vsel %vm369, %v362, %v366
    %v371 = vand.u32 2147483647, %v346
    %vm372 = vcmp.eq.f32.partialorder %v371, 8.507059e+37
    %v373 = vand.u32 %v346, 2147483648
    %v374 = vor.u32 1.1754944e-38, %v373
    %v375 = vsel %vm372, %v374, %v370
    %v376 = vmul.f32 1.0, %v375
    %v377 = vtanh.pop %v334
    %v378 = vtanh.pop %v337
    %v379 = vmul.f32 %v361, %v377
    %v380 = vmul.f32 %v376, %v378
    %381 = vmatpush.msra.mxu0 0.0
    %382 = vmatpush.msra.mxu0 0.0
    %383 = vmatpush.msra.mxu0 0.0
    %384 = vmatpush.msra.mxu0 0.0
    %385 = vmatpush.msra.mxu0 0.0
    %386 = vmatpush.msra.mxu0 0.0
    %387 = vmatpush.msra.mxu0 0.0
    %388 = vmatpush.msra.mxu0 0.0
    %389 = vmatpush.msra.mxu0 0.0
    %390 = vmatpush.msra.mxu0 0.0
    %391 = vmatpush.msra.mxu0 0.0
    %392 = vmatpush.msra.mxu0 0.0
    %393 = vmatpush.msra.mxu0 0.0
    %394 = vmatpush.msra.mxu0 0.0
    %395 = vmatpush.msra.mxu0 %v380
    %396 = vmatpush.msra.mxu0 %v379
    %397 = vmatmul.f32.gmra.mxu0 %v220
    %v398 = vpop.f32.mrf.mxu0
    %v399 = vadd.f32 %v191, %v398
    %400 = vmatmul.f32.gmra.mxu0 %v223
    %v401 = vpop.f32.mrf.mxu0
    %v402 = vadd.f32 %v196, %v401
    %403 = vmatmul.f32.gmra.mxu0 %v226
    %v404 = vpop.f32.mrf.mxu0
    %v405 = vadd.f32 %v201, %v404
    %406 = vmatmul.f32.gmra.mxu0 %v229
    %v407 = vpop.f32.mrf.mxu0
    %v408 = vadd.f32 %v206, %v407
    %409 = vmatmul.f32.gmra.mxu0 %v232
    %v410 = vpop.f32.mrf.mxu0
    %v411 = vadd.f32 %v211, %v410
    %412 = vmatmul.f32.gmra.mxu0 %v235
    %v413 = vpop.f32.mrf.mxu0
    %v414 = vadd.f32 %v216, %v413
    %415 = vdwg.mxu0
    %v416 = vadd.f32 %v290, %v399
    %v417 = vadd.f32 %v291, %v402
    %s418 = scalar_lea.vmem [#allocation5], 16
    %419 = vst.msk [vmem:[%s418] sm:$0xff] %vm274, %v416
    %420 = vst.msk [vmem:[%s418 + $0x8] sm:$0xff] %vm274, %v417
    %s421 = scalar_lea.vmem [#allocation2], 32
    %v422 = vld [vmem:[%s421] sm:$0xff]
    %v423 = vld [vmem:[%s421 + $0x8] sm:$0xff]
    %v424 = vld [vmem:[%s421 + $0x10] sm:$0xff]
    %v425 = vld [vmem:[%s421 + $0x18] sm:$0xff]
    %v426 = vadd.f32 %v422, %v405
    %v427 = vadd.f32 %v423, %v408
    %v428 = vadd.f32 %v424, %v411
    %v429 = vadd.f32 %v425, %v414
    %s430 = scalar_lea.vmem [#allocation6], 32
    %431 = vst.msk [vmem:[%s430] sm:$0xff] %vm274, %v426
    %432 = vst.msk [vmem:[%s430 + $0x8] sm:$0xff] %vm274, %v427
    %433 = vst.msk [vmem:[%s430 + $0x10] sm:$0xff] %vm274, %v428
    %434 = vst.msk [vmem:[%s430 + $0x18] sm:$0xff] %vm274, %v429
    // Predicated region
    $region30: #{tpu_custom_call.1} parent=1 // pred_check
      _
    $region31: #{tpu_custom_call.1} parent=1 // pred_check_branch
      %436 = sbr.rel (0) target = $region33
    $region32: #{tpu_custom_call.1} parent=1 // pred_region
      %438 = vsyncadd [#allocation4], 0
      %s439 = sshll.u32 [#allocation5], 4
      %s440 = int_to_ptr.vmem [resolvable:$true] %s439
      %s441 = sshll.u32 %s6, 4
      %s442 = int_to_ptr.hbm [resolvable:$true] %s441
      %447 = dma.vmem_to_hbm [thread:$0]  %s440, 512, %s442, [#allocation4], 128, 128, 8
    $region33: #{tpu_custom_call.1} parent=1 // pred_fallthru
      _
    // Predicated region
    $region34: #{tpu_custom_call.1} parent=1 // pred_check
      _
    $region35: #{tpu_custom_call.1} parent=1 // pred_check_branch
      %449 = sbr.rel (0) target = $region37
    $region36: #{tpu_custom_call.1} parent=1 // pred_region
      %451 = vsyncadd [#allocation7], 0
      %s452 = sshll.u32 [#allocation6], 4
      %s453 = int_to_ptr.vmem [resolvable:$true] %s452
      %s454 = sshll.u32 %s7, 4
      %s455 = int_to_ptr.hbm [resolvable:$true] %s454
      %460 = dma.vmem_to_hbm [thread:$0]  %s453, 1024, %s455, [#allocation7], 128, 128, 8
    $region37: #{tpu_custom_call.1} parent=1 // pred_fallthru
      _
    // Predicated region
    $region38: #{tpu_custom_call.1} parent=1 // pred_check
      _
    $region39: #{tpu_custom_call.1} parent=1 // pred_check_branch
      %462 = sbr.rel (0) target = $region41
    $region40: #{tpu_custom_call.1} parent=1 // pred_region
      %464 = dma.done [#allocation4], 512
    $region41: #{tpu_custom_call.1} parent=1 // pred_fallthru
      _
    // Predicated region
    $region42: #{tpu_custom_call.1} parent=1 // pred_check
      _
    $region43: #{tpu_custom_call.1} parent=1 // pred_check_branch
      %466 = sbr.rel (0) target = $region45
    $region44: #{tpu_custom_call.1} parent=1 // pred_region
      %468 = dma.done [#allocation7], 1024
    $region45: #{tpu_custom_call.1} parent=1 // pred_fallthru
      _
    %469 = vsyncpa [#allocation3], 1
    %470 = vsyncpa [#allocation4], 1
    %471 = vsyncpa [#allocation7], 1

</llo_original>
